<compile_context>
chip_gen: v6e
topology: v6e:2x2x1
jax: 0.10.0
libtpu: 0.0.40
codegen_flags: <defaults>
</compile_context>

<pallas_src>
import functools
import math

import jax
import jax.numpy as jnp
from jax.experimental import pallas as pl
from jax.experimental.pallas import tpu as pltpu


# ------------------------------ activations -------------------------------- #
_SQRT_2_OVER_PI = math.sqrt(2.0 / math.pi)


def _apply_act(x, act):
    """ACT2FN subset usable both in-kernel and in the pure-JAX reference."""
    if act == "relu":
        return jnp.maximum(x, 0.0)
    if act == "gelu":
        # tanh-approximate GELU (HF "gelu_new" / "gelu_pytorch_tanh").
        # TODO(synk): use exact erf-based GELU if lax.erf lowering is required.
        return 0.5 * x * (1.0 + jnp.tanh(_SQRT_2_OVER_PI * (x + 0.044715 * x * x * x)))
    if act == "quick_gelu":
        return x * jax.nn.sigmoid(1.702 * x)
    raise ValueError(f"unsupported activation: {act}")


# ------------------------------ Pallas kernel ------------------------------ #
def _proj_kernel(*refs, act, has_project_in):
    """Fused projection on one (tm, D_in) row tile.

    With project_in:
      refs = (x, w_in, b_in, w1, b1, w2, b2, out)
    Without (input_dim == hidden_size -> nn.Identity):
      refs = (x, w1, b1, w2, b2, out)

    Weights are already transposed to (in, out) layout by the wrapper.
    """
    if has_project_in:
        x_ref, wi_ref, bi_ref, w1_ref, b1_ref, w2_ref, b2_ref, o_ref = refs
        h = jnp.dot(x_ref[...], wi_ref[...], preferred_element_type=jnp.float32)
        h = h + bi_ref[...]
    else:
        x_ref, w1_ref, b1_ref, w2_ref, b2_ref, o_ref = refs
        h = x_ref[...].astype(jnp.float32)

    h = jnp.dot(h, w1_ref[...], preferred_element_type=jnp.float32) + b1_ref[...]
    h = _apply_act(h, act)
    y = jnp.dot(h, w2_ref[...], preferred_element_type=jnp.float32) + b2_ref[...]
    o_ref[...] = y.astype(o_ref.dtype)


# ------------------------------ wrapper ------------------------------------ #
def _row_tile(m):
    """Largest convenient row tile: whole batch for small M, else a divisor."""
    if m <= 1024:
        return m
    for tm in (1024, 512, 256, 128, 64, 32, 16, 8):
        if m % tm == 0:
            return tm
    return m  # fall back to a single block


def clamp_motion_projection(hidden_states, params, act="gelu"):
    """hidden_states: (..., input_dim) -> (..., projection_dim)."""
    *lead, d_in = hidden_states.shape
    m = int(math.prod(lead)) if lead else 1
    x2d = hidden_states.reshape(m, d_in)

    has_project_in = params["w_in"] is not None
    if has_project_in:
        wi = jnp.transpose(params["w_in"])            # (d_in, hidden)
        bi = params["b_in"].reshape(1, -1)
        hidden = wi.shape[1]
    else:
        hidden = d_in
    w1 = jnp.transpose(params["w1"])                  # (hidden, proj)
    b1 = params["b1"].reshape(1, -1)
    w2 = jnp.transpose(params["w2"])                  # (proj, proj)
    b2 = params["b2"].reshape(1, -1)
    proj = w2.shape[1]

    tm = _row_tile(m)
    grid = (m // tm,)

    def const(shape):
        return pl.BlockSpec(shape, lambda i: (0, 0))  # VMEM-resident weights

    in_specs = [pl.BlockSpec((tm, d_in), lambda i: (i, 0))]
    inputs = [x2d]
    if has_project_in:
        in_specs += [const((d_in, hidden)), const((1, hidden))]
        inputs += [wi, bi]
    in_specs += [const((hidden, proj)), const((1, proj)),
                 const((proj, proj)), const((1, proj))]
    inputs += [w1, b1, w2, b2]

    kern = functools.partial(_proj_kernel, act=act, has_project_in=has_project_in)
    out2d = pl.pallas_call(
        kern,
        out_shape=jax.ShapeDtypeStruct((m, proj), hidden_states.dtype),
        grid=grid,
        in_specs=in_specs,
        out_specs=pl.BlockSpec((tm, proj), lambda i: (i, 0)),
        compiler_params=pltpu.CompilerParams(
            dimension_semantics=("parallel",)),
    )(*inputs)
    return out2d.reshape(*lead, proj)


# --------------------------- parameter init -------------------------------- #
def init_params(key, input_dim, hidden_size, projection_dim):
    """PyTorch nn.Linear default init (uniform +/- 1/sqrt(fan_in))."""
    params = {"w_in": None, "b_in": None}
    if input_dim != hidden_size:
        key, k1, k2 = jax.random.split(key, 3)
        b = 1.0 / math.sqrt(input_dim)
        params["w_in"] = jax.random.uniform(k1, (hidden_size, input_dim),
                                            jnp.float32, -b, b)
        params["b_in"] = jax.random.uniform(k2, (hidden_size,), jnp.float32, -b, b)
    key, k1, k2, k3, k4 = jax.random.split(key, 5)
    b1 = 1.0 / math.sqrt(hidden_size)
    params["w1"] = jax.random.uniform(k1, (projection_dim, hidden_size),
                                      jnp.float32, -b1, b1)
    params["b1"] = jax.random.uniform(k2, (projection_dim,), jnp.float32, -b1, b1)
    b2 = 1.0 / math.sqrt(projection_dim)
    params["w2"] = jax.random.uniform(k3, (projection_dim, projection_dim),
                                      jnp.float32, -b2, b2)
    params["b2"] = jax.random.uniform(k4, (projection_dim,), jnp.float32, -b2, b2)
    return params


# ------------------------ pure-JAX reference check -------------------------- #
def _ref_forward(x, params, act):
    hp = jax.lax.Precision.HIGHEST
    h = x
    if params["w_in"] is not None:
        h = jnp.matmul(h, params["w_in"].T, precision=hp) + params["b_in"]
    h = jnp.matmul(h, params["w1"].T, precision=hp) + params["b1"]
    h = _apply_act(h, act)
    h = jnp.matmul(h, params["w2"].T, precision=hp) + params["b2"]
    return h


# --------------------------------- main ------------------------------------ #
if __name__ == "__main__":
    act = "gelu"                      # config.projection_hidden_act
    batch, seq = 2, 16

    key = jax.random.PRNGKey(0)
    kx1, kp1, kx2, kp2 = jax.random.split(key, 4)

    # Case 1: codebook_dim != hidden_size  ->  project_in is a real Linear.
    codebook_dim, hidden_size, projection_dim = 32, 128, 128
    x1 = jax.random.normal(kx1, (batch, seq, codebook_dim), jnp.float32)
    p1 = init_params(kp1, codebook_dim, hidden_size, projection_dim)
    out1 = jax.block_until_ready(clamp_motion_projection(x1, p1, act))
    ref1 = _ref_forward(x1, p1, act)
    assert out1.shape == (batch, seq, projection_dim)
    assert jnp.allclose(out1, ref1, rtol=1e-4, atol=1e-4), \
        f"max abs err = {float(jnp.max(jnp.abs(out1 - ref1)))}"

    # Case 2: codebook_dim == hidden_size  ->  project_in is nn.Identity.
    x2 = jax.random.normal(kx2, (batch, seq, hidden_size), jnp.float32)
    p2 = init_params(kp2, hidden_size, hidden_size, projection_dim)
    out2 = jax.block_until_ready(clamp_motion_projection(x2, p2, act))
    ref2 = _ref_forward(x2, p2, act)
    assert out2.shape == (batch, seq, projection_dim)
    assert jnp.allclose(out2, ref2, rtol=1e-4, atol=1e-4), \
        f"max abs err = {float(jnp.max(jnp.abs(out2 - ref2)))}"

    print("KERNEL_OK")
</pallas_src>

<mosaic_0001>
module attributes {stable_mosaic.version = 11 : i64} {
  func.func @_proj_kernel(%arg0: i32, %arg1: memref<32x32xf32, #tpu.memory_space<vmem>>, %arg2: memref<32x128xf32, #tpu.memory_space<vmem>>, %arg3: memref<1x128xf32, #tpu.memory_space<vmem>>, %arg4: memref<128x128xf32, #tpu.memory_space<vmem>>, %arg5: memref<1x128xf32, #tpu.memory_space<vmem>>, %arg6: memref<128x128xf32, #tpu.memory_space<vmem>>, %arg7: memref<1x128xf32, #tpu.memory_space<vmem>>, %arg8: memref<32x128xf32, #tpu.memory_space<vmem>>) attributes {dimension_semantics = [#tpu.dimension_semantics<parallel>], iteration_bounds = array<i64: 1>, scalar_prefetch = 0 : i64, scratch_operands = 0 : i64, tpu.core_type = #tpu.core_type<tc>, window_params = [{transform_indices = @transform_0, window_bounds = array<i64: 32, 32>}, {pipeline_mode = #tpu.pipeline_mode<synchronous>, transform_indices = @transform_1, window_bounds = array<i64: 32, 128>}, {pipeline_mode = #tpu.pipeline_mode<synchronous>, transform_indices = @transform_2, window_bounds = array<i64: 1, 128>}, {pipeline_mode = #tpu.pipeline_mode<synchronous>, transform_indices = @transform_3, window_bounds = array<i64: 128, 128>}, {pipeline_mode = #tpu.pipeline_mode<synchronous>, transform_indices = @transform_4, window_bounds = array<i64: 1, 128>}, {pipeline_mode = #tpu.pipeline_mode<synchronous>, transform_indices = @transform_5, window_bounds = array<i64: 128, 128>}, {pipeline_mode = #tpu.pipeline_mode<synchronous>, transform_indices = @transform_6, window_bounds = array<i64: 1, 128>}, {transform_indices = @transform_7, window_bounds = array<i64: 32, 128>}]} {
    %c0 = arith.constant 0 : index
    %c0_0 = arith.constant 0 : index
    %0 = vector.load %arg1[%c0, %c0_0] : memref<32x32xf32, #tpu.memory_space<vmem>>, vector<32x32xf32>
    %c0_1 = arith.constant 0 : index
    %c0_2 = arith.constant 0 : index
    %1 = vector.load %arg2[%c0_1, %c0_2] : memref<32x128xf32, #tpu.memory_space<vmem>>, vector<32x128xf32>
    %cst = arith.constant dense<0.000000e+00> : vector<32x128xf32>
    %2 = tpu.matmul %0, %1, %cst {dimension_numbers = #tpu.dot_dimension_numbers<[1], [0], [0], [1], [0, 0, 1, 1], [], []>} : vector<32x32xf32>, vector<32x128xf32>, vector<32x128xf32> -> vector<32x128xf32>
    %c0_3 = arith.constant 0 : index
    %c0_4 = arith.constant 0 : index
    %3 = vector.load %arg3[%c0_3, %c0_4] : memref<1x128xf32, #tpu.memory_space<vmem>>, vector<1x128xf32>
    %4 = vector.broadcast %3 : vector<1x128xf32> to vector<32x128xf32>
    %5 = arith.addf %2, %4 : vector<32x128xf32>
    %c0_5 = arith.constant 0 : index
    %c0_6 = arith.constant 0 : index
    %6 = vector.load %arg4[%c0_5, %c0_6] : memref<128x128xf32, #tpu.memory_space<vmem>>, vector<128x128xf32>
    %cst_7 = arith.constant dense<0.000000e+00> : vector<32x128xf32>
    %7 = tpu.matmul %5, %6, %cst_7 {dimension_numbers = #tpu.dot_dimension_numbers<[1], [0], [0], [1], [0, 0, 1, 1], [], []>} : vector<32x128xf32>, vector<128x128xf32>, vector<32x128xf32> -> vector<32x128xf32>
    %c0_8 = arith.constant 0 : index
    %c0_9 = arith.constant 0 : index
    %8 = vector.load %arg5[%c0_8, %c0_9] : memref<1x128xf32, #tpu.memory_space<vmem>>, vector<1x128xf32>
    %9 = vector.broadcast %8 : vector<1x128xf32> to vector<32x128xf32>
    %10 = arith.addf %7, %9 : vector<32x128xf32>
    %cst_10 = arith.constant 5.000000e-01 : f32
    %11 = vector.broadcast %cst_10 : f32 to vector<32x128xf32>
    %12 = arith.mulf %11, %10 : vector<32x128xf32>
    %cst_11 = arith.constant 4.471500e-02 : f32
    %13 = vector.broadcast %cst_11 : f32 to vector<32x128xf32>
    %14 = arith.mulf %13, %10 : vector<32x128xf32>
    %15 = arith.mulf %14, %10 : vector<32x128xf32>
    %16 = arith.mulf %15, %10 : vector<32x128xf32>
    %17 = arith.addf %10, %16 : vector<32x128xf32>
    %cst_12 = arith.constant 0.797884583 : f32
    %18 = vector.broadcast %cst_12 : f32 to vector<32x128xf32>
    %19 = arith.mulf %18, %17 : vector<32x128xf32>
    %20 = math.tanh %19 : vector<32x128xf32>
    %cst_13 = arith.constant 1.000000e+00 : f32
    %21 = vector.broadcast %cst_13 : f32 to vector<32x128xf32>
    %22 = arith.addf %21, %20 : vector<32x128xf32>
    %23 = arith.mulf %12, %22 : vector<32x128xf32>
    %c0_14 = arith.constant 0 : index
    %c0_15 = arith.constant 0 : index
    %24 = vector.load %arg6[%c0_14, %c0_15] : memref<128x128xf32, #tpu.memory_space<vmem>>, vector<128x128xf32>
    %cst_16 = arith.constant dense<0.000000e+00> : vector<32x128xf32>
    %25 = tpu.matmul %23, %24, %cst_16 {dimension_numbers = #tpu.dot_dimension_numbers<[1], [0], [0], [1], [0, 0, 1, 1], [], []>} : vector<32x128xf32>, vector<128x128xf32>, vector<32x128xf32> -> vector<32x128xf32>
    %c0_17 = arith.constant 0 : index
    %c0_18 = arith.constant 0 : index
    %26 = vector.load %arg7[%c0_17, %c0_18] : memref<1x128xf32, #tpu.memory_space<vmem>>, vector<1x128xf32>
    %27 = vector.broadcast %26 : vector<1x128xf32> to vector<32x128xf32>
    %28 = arith.addf %25, %27 : vector<32x128xf32>
    %c0_19 = arith.constant 0 : index
    %c0_20 = arith.constant 0 : index
    %29 = vector.load %arg8[%c0_19, %c0_20] : memref<32x128xf32, #tpu.memory_space<vmem>>, vector<32x128xf32>
    tpu.vector_store %arg8[%c0_19, %c0_20], %28 {strides = array<i32>} : memref<32x128xf32, #tpu.memory_space<vmem>>, vector<32x128xf32>,
    return
  }
  func.func @transform_0(%arg0: i32) -> (i32, i32) {
    %c0_i32 = arith.constant 0 : i32
    %c0_i32_0 = arith.constant 0 : i32
    return %arg0, %c0_i32 : i32, i32
  }
  func.func @transform_1(%arg0: i32) -> (i32, i32) {
    %c0_i32 = arith.constant 0 : i32
    %c0_i32_0 = arith.constant 0 : i32
    %c0_i32_1 = arith.constant 0 : i32
    return %c0_i32, %c0_i32_0 : i32, i32
  }
  func.func @transform_2(%arg0: i32) -> (i32, i32) {
    %c0_i32 = arith.constant 0 : i32
    %c0_i32_0 = arith.constant 0 : i32
    %c0_i32_1 = arith.constant 0 : i32
    return %c0_i32, %c0_i32_0 : i32, i32
  }
  func.func @transform_3(%arg0: i32) -> (i32, i32) {
    %c0_i32 = arith.constant 0 : i32
    %c0_i32_0 = arith.constant 0 : i32
    %c0_i32_1 = arith.constant 0 : i32
    return %c0_i32, %c0_i32_0 : i32, i32
  }
  func.func @transform_4(%arg0: i32) -> (i32, i32) {
    %c0_i32 = arith.constant 0 : i32
    %c0_i32_0 = arith.constant 0 : i32
    %c0_i32_1 = arith.constant 0 : i32
    return %c0_i32, %c0_i32_0 : i32, i32
  }
  func.func @transform_5(%arg0: i32) -> (i32, i32) {
    %c0_i32 = arith.constant 0 : i32
    %c0_i32_0 = arith.constant 0 : i32
    %c0_i32_1 = arith.constant 0 : i32
    return %c0_i32, %c0_i32_0 : i32, i32
  }
  func.func @transform_6(%arg0: i32) -> (i32, i32) {
    %c0_i32 = arith.constant 0 : i32
    %c0_i32_0 = arith.constant 0 : i32
    %c0_i32_1 = arith.constant 0 : i32
    return %c0_i32, %c0_i32_0 : i32, i32
  }
  func.func @transform_7(%arg0: i32) -> (i32, i32) {
    %c0_i32 = arith.constant 0 : i32
    %c0_i32_0 = arith.constant 0 : i32
    return %arg0, %c0_i32 : i32, i32
  }
}

</mosaic_0001>

<llo_original>
// kernel: tpu_custom_call.1
$region0: #{tpu_custom_call.1}
  #allocation0 [shape = 'u32[]', space=smem, size = 0x4, offset = 0x4, fixed_abs, tag = 'smem constant byte address 0x4 - core index']
  #allocation1 [shape = 'u32[144,128]{1,0:T(1,128)}', space=vmem, size = 0x12000, scoped, tag = 'internal scratch']
  %s0 = inlined_call_operand.hbm [shape: f32[32,32], index: 0, kind: input, shape index: {}]
  %s1 = inlined_call_operand.hbm [shape: f32[32,128], index: 1, kind: input, shape index: {}]
  %s2 = inlined_call_operand.vmem [shape: f32[1,128], index: 2, kind: input, shape index: {}]
  %s3 = inlined_call_operand.hbm [shape: f32[128,128], index: 3, kind: input, shape index: {}]
  %s4 = inlined_call_operand.vmem [shape: f32[1,128], index: 4, kind: input, shape index: {}]
  %s5 = inlined_call_operand.hbm [shape: f32[128,128], index: 5, kind: input, shape index: {}]
  %s6 = inlined_call_operand.vmem [shape: f32[1,128], index: 6, kind: input, shape index: {}]
  %s7 = inlined_call_operand.hbm [shape: f32[32,128], index: 7, kind: output, shape index: {}]
  %s8 = sld [smem:[#allocation0]]
  $region54: #{tpu_custom_call.1} parent=0
    _
  %s10 = ssub.s32 1, %s8
  %s11 = scalar_select 0, %s10, %s8
  $region1: #{tpu_custom_call.1} parent=0
    #allocation2 [shape = 'u8[16384]{0}', space=vmem, size = 0x4000, scoped, tag = 'input window, operand 0, single buffered']
    #allocation3 [shape = 's32[1]{0}', space=sflag, size = 0x4, scoped, tag = 'scoped memory for tpu_custom_call.1']
    #allocation4 [shape = 's32[1]{0}', space=sflag, size = 0x4, scoped, tag = 'scoped memory for tpu_custom_call.1']
    #allocation5 [shape = 'u8[16384]{0}', space=vmem, size = 0x4000, scoped, tag = 'input window, operand 1, single buffered']
    #allocation6 [shape = 's32[1]{0}', space=sflag, size = 0x4, scoped, tag = 'scoped memory for tpu_custom_call.1']
    #allocation7 [shape = 'u8[65536]{0}', space=vmem, size = 0x10000, scoped, tag = 'input window, operand 3, single buffered']
    #allocation8 [shape = 'u8[65536]{0}', space=vmem, size = 0x10000, scoped, tag = 'input window, operand 5, single buffered']
    #allocation9 [shape = 's32[1]{0}', space=sflag, size = 0x4, scoped, tag = 'scoped memory for tpu_custom_call.1']
    #allocation10 [shape = 'u8[16384]{0}', space=vmem, size = 0x4000, scoped, tag = 'output window, operand 0, single buffered']
    %12 = vsyncpa [#allocation3], 0
    %13 = vsyncpa [#allocation6], 0
    %14 = vsyncpa [#allocation9], 0
    %15 = vsyncpa [#allocation4], 0
    // Predicated region
    $region2: #{tpu_custom_call.1} parent=1 // pred_check
      _
    $region3: #{tpu_custom_call.1} parent=1 // pred_check_branch
      %17 = sbr.rel (0) target = $region5
    $region4: #{tpu_custom_call.1} parent=1 // pred_region
      %s19 = ssub.s32 512, 512
      %20 = vsyncadd [#allocation3], %s19
      %s21 = sshll.u32 [#allocation2], 4
      %s22 = int_to_ptr.vmem [resolvable:$true] %s21
      %27 = dma.hbm_to_vmem [thread:$0]  %s0, 512, %s22, [#allocation3], 128, 128, 8
    $region5: #{tpu_custom_call.1} parent=1 // pred_fallthru
      _
    // Predicated region
    $region6: #{tpu_custom_call.1} parent=1 // pred_check
      _
    $region7: #{tpu_custom_call.1} parent=1 // pred_check_branch
      %29 = sbr.rel (0) target = $region9
    $region8: #{tpu_custom_call.1} parent=1 // pred_region
      %s31 = ssub.s32 512, 512
      %32 = vsyncadd [#allocation6], %s31
      %s33 = sshll.u32 [#allocation5], 4
      %s34 = int_to_ptr.vmem [resolvable:$true] %s33
      %39 = dma.hbm_to_vmem [thread:$0]  %s1, 512, %s34, [#allocation6], 128, 128, 8
    $region9: #{tpu_custom_call.1} parent=1 // pred_fallthru
      _
    // Predicated region
    $region10: #{tpu_custom_call.1} parent=1 // pred_check
      _
    $region11: #{tpu_custom_call.1} parent=1 // pred_check_branch
      %41 = sbr.rel (0) target = $region13
    $region12: #{tpu_custom_call.1} parent=1 // pred_region
      _
    $region13: #{tpu_custom_call.1} parent=1 // pred_fallthru
      _
    // Predicated region
    $region14: #{tpu_custom_call.1} parent=1 // pred_check
      _
    $region15: #{tpu_custom_call.1} parent=1 // pred_check_branch
      %43 = sbr.rel (0) target = $region17
    $region16: #{tpu_custom_call.1} parent=1 // pred_region
      %s45 = ssub.s32 2048, 2048
      %46 = vsyncadd [#allocation6], %s45
      %s47 = sshll.u32 [#allocation7], 4
      %s48 = int_to_ptr.vmem [resolvable:$true] %s47
      %53 = dma.hbm_to_vmem [thread:$0]  %s3, 2048, %s48, [#allocation6], 128, 128, 8
    $region17: #{tpu_custom_call.1} parent=1 // pred_fallthru
      _
    // Predicated region
    $region18: #{tpu_custom_call.1} parent=1 // pred_check
      _
    $region19: #{tpu_custom_call.1} parent=1 // pred_check_branch
      %55 = sbr.rel (0) target = $region21
    $region20: #{tpu_custom_call.1} parent=1 // pred_region
      _
    $region21: #{tpu_custom_call.1} parent=1 // pred_fallthru
      _
    // Predicated region
    $region22: #{tpu_custom_call.1} parent=1 // pred_check
      _
    $region23: #{tpu_custom_call.1} parent=1 // pred_check_branch
      %57 = sbr.rel (0) target = $region25
    $region24: #{tpu_custom_call.1} parent=1 // pred_region
      %s59 = ssub.s32 2048, 2048
      %60 = vsyncadd [#allocation9], %s59
      %s61 = sshll.u32 [#allocation8], 4
      %s62 = int_to_ptr.vmem [resolvable:$true] %s61
      %67 = dma.hbm_to_vmem [thread:$0]  %s5, 2048, %s62, [#allocation9], 128, 128, 8
    $region25: #{tpu_custom_call.1} parent=1 // pred_fallthru
      _
    // Predicated region
    $region26: #{tpu_custom_call.1} parent=1 // pred_check
      _
    $region27: #{tpu_custom_call.1} parent=1 // pred_check_branch
      %69 = sbr.rel (0) target = $region29
    $region28: #{tpu_custom_call.1} parent=1 // pred_region
      _
    $region29: #{tpu_custom_call.1} parent=1 // pred_fallthru
      _
    // Predicated region
    $region30: #{tpu_custom_call.1} parent=1 // pred_check
      _
    $region31: #{tpu_custom_call.1} parent=1 // pred_check_branch
      %71 = sbr.rel (0) target = $region33
    $region32: #{tpu_custom_call.1} parent=1 // pred_region
      %72 = dma.done [#allocation3], 512
    $region33: #{tpu_custom_call.1} parent=1 // pred_fallthru
      _
    // Predicated region
    $region34: #{tpu_custom_call.1} parent=1 // pred_check
      _
    $region35: #{tpu_custom_call.1} parent=1 // pred_check_branch
      %74 = sbr.rel (0) target = $region37
    $region36: #{tpu_custom_call.1} parent=1 // pred_region
      %75 = dma.done [#allocation6], 512
    $region37: #{tpu_custom_call.1} parent=1 // pred_fallthru
      _
    // Predicated region
    $region38: #{tpu_custom_call.1} parent=1 // pred_check
      _
    $region39: #{tpu_custom_call.1} parent=1 // pred_check_branch
      %77 = sbr.rel (0) target = $region41
    $region40: #{tpu_custom_call.1} parent=1 // pred_region
      %78 = dma.done [#allocation6], 2048
    $region41: #{tpu_custom_call.1} parent=1 // pred_fallthru
      _
    // Predicated region
    $region42: #{tpu_custom_call.1} parent=1 // pred_check
      _
    $region43: #{tpu_custom_call.1} parent=1 // pred_check_branch
      %80 = sbr.rel (0) target = $region45
    $region44: #{tpu_custom_call.1} parent=1 // pred_region
      %81 = dma.done [#allocation9], 2048
    $region45: #{tpu_custom_call.1} parent=1 // pred_fallthru
      _
    %v82 = vld [vmem:[#allocation2] sm:$0xff]
    %v83 = vld [vmem:[#allocation2 + $0x8] sm:$0xff]
    %v84 = vld [vmem:[#allocation2 + $0x10] sm:$0xff]
    %v85 = vld [vmem:[#allocation2 + $0x18] sm:$0xff]
    %v86 = vld [vmem:[#allocation5] sm:$0xff]
    %v87 = vld [vmem:[#allocation5 + $0x8] sm:$0xff]
    %v88 = vld [vmem:[#allocation5 + $0x10] sm:$0xff]
    %v89 = vld [vmem:[#allocation5 + $0x18] sm:$0xff]
    %v90 = vld [vmem:[%s2] sm:$0x1]
    %v92 = vlaneseq
    %v93 = vshrl.u32 %v92, 7
    %v94 = vsub.s32 0, %v93
    %v95 = vrot.slane %v90, %v94
    %vm97 = vcmask 261120
    %v99 = vsel %vm97, %v82, 0
    %v102 = vsel %vm97, %v83, 0
    %v105 = vsel %vm97, %v84, 0
    %v108 = vsel %vm97, %v85, 0
    %110 = vmatprep.subr.mxu0 0.0
    %111 = vmatpush1.msra.mxu0 0.0
    %112 = vmatprep.subr.mxu0 0.0
    %113 = vmatpush1.msra.mxu0 0.0
    %114 = vmatprep.subr.mxu0 0.0
    %115 = vmatpush1.msra.mxu0 0.0
    %116 = vmatprep.subr.mxu0 0.0
    %117 = vmatpush1.msra.mxu0 0.0
    %118 = vmatprep.subr.mxu0 0.0
    %119 = vmatpush1.msra.mxu0 0.0
    %120 = vmatprep.subr.mxu0 0.0
    %121 = vmatpush1.msra.mxu0 0.0
    %122 = vmatprep.subr.mxu0 0.0
    %123 = vmatpush1.msra.mxu0 0.0
    %124 = vmatprep.subr.mxu0 0.0
    %125 = vmatpush1.msra.mxu0 0.0
    %126 = vmatprep.subr.mxu0 0.0
    %127 = vmatpush1.msra.mxu0 0.0
    %128 = vmatprep.subr.mxu0 0.0
    %129 = vmatpush1.msra.mxu0 0.0
    %130 = vmatprep.subr.mxu0 0.0
    %131 = vmatpush1.msra.mxu0 0.0
    %132 = vmatprep.subr.mxu0 0.0
    %133 = vmatpush1.msra.mxu0 0.0
    %134 = vmatprep.subr.mxu0 0.0
    %135 = vmatpush1.msra.mxu0 %v89
    %136 = vmatprep.subr.mxu0 0.0
    %137 = vmatpush1.msra.mxu0 %v88
    %138 = vmatprep.subr.mxu0 0.0
    %139 = vmatpush1.msra.mxu0 %v87
    %140 = vmatprep.subr.mxu0 0.0
    %141 = vmatpush1.msra.mxu0 %v86
    %142 = vmatprep.subr.mxu0 0.0
    %143 = vmatpush2.msra.mxu0 0.0
    %144 = vmatprep.subr.mxu0 0.0
    %145 = vmatpush2.msra.mxu0 0.0
    %146 = vmatprep.subr.mxu0 0.0
    %147 = vmatpush2.msra.mxu0 0.0
    %148 = vmatprep.subr.mxu0 0.0
    %149 = vmatpush2.msra.mxu0 0.0
    %150 = vmatprep.subr.mxu0 0.0
    %151 = vmatpush2.msra.mxu0 0.0
    %152 = vmatprep.subr.mxu0 0.0
    %153 = vmatpush2.msra.mxu0 0.0
    %154 = vmatprep.subr.mxu0 0.0
    %155 = vmatpush2.msra.mxu0 0.0
    %156 = vmatprep.subr.mxu0 0.0
    %157 = vmatpush2.msra.mxu0 0.0
    %158 = vmatprep.subr.mxu0 0.0
    %159 = vmatpush2.msra.mxu0 0.0
    %160 = vmatprep.subr.mxu0 0.0
    %161 = vmatpush2.msra.mxu0 0.0
    %162 = vmatprep.subr.mxu0 0.0
    %163 = vmatpush2.msra.mxu0 0.0
    %164 = vmatprep.subr.mxu0 0.0
    %165 = vmatpush2.msra.mxu0 0.0
    %166 = vmatprep.subr.mxu0 0.0
    %167 = vmatpush2.msra.mxu0 0.0
    %168 = vmatprep.subr.mxu0 0.0
    %169 = vmatpush2.msra.mxu0 0.0
    %170 = vmatprep.subr.mxu0 0.0
    %171 = vmatpush2.msra.mxu0 0.0
    %172 = vmatprep.subr.mxu0 0.0
    %173 = vmatpush2.msra.mxu0 0.0
    %174 = vmatprep.mubr.f32.mxu0 0.0
    %175 = vmatmul.mubr.f32.gmra.mxu0 %v99
    %v176 = vpop.f32.mrf.mxu0
    %v177 = vadd.f32 %v95, %v176
    %v178 = vpop.f32.mrf.mxu0
    %179 = vmatprep.mubr.f32.mxu0 0.0
    %180 = vmatmul.mubr.f32.gmra.mxu0 %v102
    %v181 = vpop.f32.mrf.mxu0
    %v182 = vadd.f32 %v95, %v181
    %v183 = vpop.f32.mrf.mxu0
    %184 = vmatprep.mubr.f32.mxu0 0.0
    %185 = vmatmul.mubr.f32.gmra.mxu0 %v105
    %v186 = vpop.f32.mrf.mxu0
    %v187 = vadd.f32 %v95, %v186
    %v188 = vpop.f32.mrf.mxu0
    %189 = vmatprep.mubr.f32.mxu0 0.0
    %190 = vmatmul.mubr.f32.gmra.mxu0 %v108
    %v191 = vpop.f32.mrf.mxu0
    %v192 = vadd.f32 %v95, %v191
    %v193 = vpop.f32.mrf.mxu0
    %194 = vdwg.mxu0
    %v195 = vld [vmem:[#allocation7] sm:$0xff]
    %v196 = vld [vmem:[#allocation7 + $0x8] sm:$0xff]
    %v197 = vld [vmem:[#allocation7 + $0x10] sm:$0xff]
    %v198 = vld [vmem:[#allocation7 + $0x18] sm:$0xff]
    %v199 = vld [vmem:[#allocation7 + $0x20] sm:$0xff]
    %v200 = vld [vmem:[#allocation7 + $0x28] sm:$0xff]
    %v201 = vld [vmem:[#allocation7 + $0x30] sm:$0xff]
    %v202 = vld [vmem:[#allocation7 + $0x38] sm:$0xff]
    %v203 = vld [vmem:[#allocation7 + $0x40] sm:$0xff]
    %v204 = vld [vmem:[#allocation7 + $0x48] sm:$0xff]
    %v205 = vld [vmem:[#allocation7 + $0x50] sm:$0xff]
    %v206 = vld [vmem:[#allocation7 + $0x58] sm:$0xff]
    %v207 = vld [vmem:[#allocation7 + $0x60] sm:$0xff]
    %v208 = vld [vmem:[#allocation7 + $0x68] sm:$0xff]
    %v209 = vld [vmem:[#allocation7 + $0x70] sm:$0xff]
    %v210 = vld [vmem:[#allocation7 + $0x78] sm:$0xff]
    %v211 = vld [vmem:[%s4] sm:$0x1]
    %v213 = vlaneseq
    %v214 = vshrl.u32 %v213, 7
    %v215 = vsub.s32 0, %v214
    %v216 = vrot.slane %v211, %v215
    %218 = vmatprep.subr.mxu0 0.0
    %219 = vmatpush1.msra.mxu0 %v210
    %220 = vmatprep.subr.mxu0 0.0
    %221 = vmatpush1.msra.mxu0 %v209
    %222 = vmatprep.subr.mxu0 0.0
    %223 = vmatpush1.msra.mxu0 %v208
    %224 = vmatprep.subr.mxu0 0.0
    %225 = vmatpush1.msra.mxu0 %v207
    %226 = vmatprep.subr.mxu0 0.0
    %227 = vmatpush1.msra.mxu0 %v206
    %228 = vmatprep.subr.mxu0 0.0
    %229 = vmatpush1.msra.mxu0 %v205
    %230 = vmatprep.subr.mxu0 0.0
    %231 = vmatpush1.msra.mxu0 %v204
    %232 = vmatprep.subr.mxu0 0.0
    %233 = vmatpush1.msra.mxu0 %v203
    %234 = vmatprep.subr.mxu0 0.0
    %235 = vmatpush1.msra.mxu0 %v202
    %236 = vmatprep.subr.mxu0 0.0
    %237 = vmatpush1.msra.mxu0 %v201
    %238 = vmatprep.subr.mxu0 0.0
    %239 = vmatpush1.msra.mxu0 %v200
    %240 = vmatprep.subr.mxu0 0.0
    %241 = vmatpush1.msra.mxu0 %v199
    %242 = vmatprep.subr.mxu0 0.0
    %243 = vmatpush1.msra.mxu0 %v198
    %244 = vmatprep.subr.mxu0 0.0
    %245 = vmatpush1.msra.mxu0 %v197
    %246 = vmatprep.subr.mxu0 0.0
    %247 = vmatpush1.msra.mxu0 %v196
    %248 = vmatprep.subr.mxu0 0.0
    %249 = vmatpush1.msra.mxu0 %v195
    %250 = vmatprep.subr.mxu0 0.0
    %251 = vmatpush2.msra.mxu0 0.0
    %252 = vmatprep.subr.mxu0 0.0
    %253 = vmatpush2.msra.mxu0 0.0
    %254 = vmatprep.subr.mxu0 0.0
    %255 = vmatpush2.msra.mxu0 0.0
    %256 = vmatprep.subr.mxu0 0.0
    %257 = vmatpush2.msra.mxu0 0.0
    %258 = vmatprep.subr.mxu0 0.0
    %259 = vmatpush2.msra.mxu0 0.0
    %260 = vmatprep.subr.mxu0 0.0
    %261 = vmatpush2.msra.mxu0 0.0
    %262 = vmatprep.subr.mxu0 0.0
    %263 = vmatpush2.msra.mxu0 0.0
    %264 = vmatprep.subr.mxu0 0.0
    %265 = vmatpush2.msra.mxu0 0.0
    %266 = vmatprep.subr.mxu0 0.0
    %267 = vmatpush2.msra.mxu0 0.0
    %268 = vmatprep.subr.mxu0 0.0
    %269 = vmatpush2.msra.mxu0 0.0
    %270 = vmatprep.subr.mxu0 0.0
    %271 = vmatpush2.msra.mxu0 0.0
    %272 = vmatprep.subr.mxu0 0.0
    %273 = vmatpush2.msra.mxu0 0.0
    %274 = vmatprep.subr.mxu0 0.0
    %275 = vmatpush2.msra.mxu0 0.0
    %276 = vmatprep.subr.mxu0 0.0
    %277 = vmatpush2.msra.mxu0 0.0
    %278 = vmatprep.subr.mxu0 0.0
    %279 = vmatpush2.msra.mxu0 0.0
    %280 = vmatprep.subr.mxu0 0.0
    %281 = vmatpush2.msra.mxu0 0.0
    %282 = vmatprep.mubr.f32.mxu0 0.0
    %283 = vmatmul.mubr.f32.gmra.mxu0 %v177
    %v284 = vpop.f32.mrf.mxu0
    %v285 = vadd.f32 %v216, %v284
    %v286 = vpop.f32.mrf.mxu0
    %287 = vmatprep.mubr.f32.mxu0 0.0
    %288 = vmatmul.mubr.f32.gmra.mxu0 %v182
    %v289 = vpop.f32.mrf.mxu0
    %v290 = vadd.f32 %v216, %v289
    %v291 = vpop.f32.mrf.mxu0
    %292 = vmatprep.mubr.f32.mxu0 0.0
    %293 = vmatmul.mubr.f32.gmra.mxu0 %v187
    %v294 = vpop.f32.mrf.mxu0
    %v295 = vadd.f32 %v216, %v294
    %v296 = vpop.f32.mrf.mxu0
    %297 = vmatprep.mubr.f32.mxu0 0.0
    %298 = vmatmul.mubr.f32.gmra.mxu0 %v192
    %v299 = vpop.f32.mrf.mxu0
    %v300 = vadd.f32 %v216, %v299
    %v301 = vpop.f32.mrf.mxu0
    %302 = vdwg.mxu0
    %v303 = vmul.f32 %v285, 0.5
    %v304 = vmul.f32 %v290, 0.5
    %v305 = vmul.f32 %v295, 0.5
    %v306 = vmul.f32 %v300, 0.5
    %v307 = vmul.f32 %v285, 0.044715
    %v308 = vmul.f32 %v290, 0.044715
    %v309 = vmul.f32 %v295, 0.044715
    %v310 = vmul.f32 %v300, 0.044715
    %v311 = vmul.f32 %v307, %v285
    %v312 = vmul.f32 %v308, %v290
    %v313 = vmul.f32 %v309, %v295
    %v314 = vmul.f32 %v310, %v300
    %v315 = vmul.f32 %v311, %v285
    %v316 = vmul.f32 %v312, %v290
    %v317 = vmul.f32 %v313, %v295
    %v318 = vmul.f32 %v314, %v300
    %v319 = vadd.f32 %v285, %v315
    %v320 = vadd.f32 %v290, %v316
    %v321 = vadd.f32 %v295, %v317
    %v322 = vadd.f32 %v300, %v318
    %v323 = vmul.f32 %v319, 0.7978846
    %v324 = vmul.f32 %v320, 0.7978846
    %v325 = vmul.f32 %v321, 0.7978846
    %v326 = vmul.f32 %v322, 0.7978846
    %v327 = vtanh.pop %v323
    %v328 = vtanh.pop %v324
    %v329 = vtanh.pop %v325
    %v330 = vtanh.pop %v326
    %v331 = vadd.f32 %v327, 1.0
    %v332 = vadd.f32 %v328, 1.0
    %v333 = vadd.f32 %v329, 1.0
    %v334 = vadd.f32 %v330, 1.0
    %v335 = vmul.f32 %v303, %v331
    %v336 = vmul.f32 %v304, %v332
    %v337 = vmul.f32 %v305, %v333
    %v338 = vmul.f32 %v306, %v334
    %v339 = vld [vmem:[#allocation8] sm:$0xff]
    %v340 = vld [vmem:[#allocation8 + $0x8] sm:$0xff]
    %v341 = vld [vmem:[#allocation8 + $0x10] sm:$0xff]
    %v342 = vld [vmem:[#allocation8 + $0x18] sm:$0xff]
    %v343 = vld [vmem:[#allocation8 + $0x20] sm:$0xff]
    %v344 = vld [vmem:[#allocation8 + $0x28] sm:$0xff]
    %v345 = vld [vmem:[#allocation8 + $0x30] sm:$0xff]
    %v346 = vld [vmem:[#allocation8 + $0x38] sm:$0xff]
    %v347 = vld [vmem:[#allocation8 + $0x40] sm:$0xff]
    %v348 = vld [vmem:[#allocation8 + $0x48] sm:$0xff]
    %v349 = vld [vmem:[#allocation8 + $0x50] sm:$0xff]
    %v350 = vld [vmem:[#allocation8 + $0x58] sm:$0xff]
    %v351 = vld [vmem:[#allocation8 + $0x60] sm:$0xff]
    %v352 = vld [vmem:[#allocation8 + $0x68] sm:$0xff]
    %v353 = vld [vmem:[#allocation8 + $0x70] sm:$0xff]
    %v354 = vld [vmem:[#allocation8 + $0x78] sm:$0xff]
    %v355 = vld [vmem:[%s6] sm:$0x1]
    %v357 = vlaneseq
    %v358 = vshrl.u32 %v357, 7
    %v359 = vsub.s32 0, %v358
    %v360 = vrot.slane %v355, %v359
    %362 = vmatprep.subr.mxu0 0.0
    %363 = vmatpush1.msra.mxu0 %v354
    %364 = vmatprep.subr.mxu0 0.0
    %365 = vmatpush1.msra.mxu0 %v353
    %366 = vmatprep.subr.mxu0 0.0
    %367 = vmatpush1.msra.mxu0 %v352
    %368 = vmatprep.subr.mxu0 0.0
    %369 = vmatpush1.msra.mxu0 %v351
    %370 = vmatprep.subr.mxu0 0.0
    %371 = vmatpush1.msra.mxu0 %v350
    %372 = vmatprep.subr.mxu0 0.0
    %373 = vmatpush1.msra.mxu0 %v349
    %374 = vmatprep.subr.mxu0 0.0
    %375 = vmatpush1.msra.mxu0 %v348
    %376 = vmatprep.subr.mxu0 0.0
    %377 = vmatpush1.msra.mxu0 %v347
    %378 = vmatprep.subr.mxu0 0.0
    %379 = vmatpush1.msra.mxu0 %v346
    %380 = vmatprep.subr.mxu0 0.0
    %381 = vmatpush1.msra.mxu0 %v345
    %382 = vmatprep.subr.mxu0 0.0
    %383 = vmatpush1.msra.mxu0 %v344
    %384 = vmatprep.subr.mxu0 0.0
    %385 = vmatpush1.msra.mxu0 %v343
    %386 = vmatprep.subr.mxu0 0.0
    %387 = vmatpush1.msra.mxu0 %v342
    %388 = vmatprep.subr.mxu0 0.0
    %389 = vmatpush1.msra.mxu0 %v341
    %390 = vmatprep.subr.mxu0 0.0
    %391 = vmatpush1.msra.mxu0 %v340
    %392 = vmatprep.subr.mxu0 0.0
    %393 = vmatpush1.msra.mxu0 %v339
    %394 = vmatprep.subr.mxu0 0.0
    %395 = vmatpush2.msra.mxu0 0.0
    %396 = vmatprep.subr.mxu0 0.0
    %397 = vmatpush2.msra.mxu0 0.0
    %398 = vmatprep.subr.mxu0 0.0
    %399 = vmatpush2.msra.mxu0 0.0
    %400 = vmatprep.subr.mxu0 0.0
    %401 = vmatpush2.msra.mxu0 0.0
    %402 = vmatprep.subr.mxu0 0.0
    %403 = vmatpush2.msra.mxu0 0.0
    %404 = vmatprep.subr.mxu0 0.0
    %405 = vmatpush2.msra.mxu0 0.0
    %406 = vmatprep.subr.mxu0 0.0
    %407 = vmatpush2.msra.mxu0 0.0
    %408 = vmatprep.subr.mxu0 0.0
    %409 = vmatpush2.msra.mxu0 0.0
    %410 = vmatprep.subr.mxu0 0.0
    %411 = vmatpush2.msra.mxu0 0.0
    %412 = vmatprep.subr.mxu0 0.0
    %413 = vmatpush2.msra.mxu0 0.0
    %414 = vmatprep.subr.mxu0 0.0
    %415 = vmatpush2.msra.mxu0 0.0
    %416 = vmatprep.subr.mxu0 0.0
    %417 = vmatpush2.msra.mxu0 0.0
    %418 = vmatprep.subr.mxu0 0.0
    %419 = vmatpush2.msra.mxu0 0.0
    %420 = vmatprep.subr.mxu0 0.0
    %421 = vmatpush2.msra.mxu0 0.0
    %422 = vmatprep.subr.mxu0 0.0
    %423 = vmatpush2.msra.mxu0 0.0
    %424 = vmatprep.subr.mxu0 0.0
    %425 = vmatpush2.msra.mxu0 0.0
    %426 = vmatprep.mubr.f32.mxu0 0.0
    %427 = vmatmul.mubr.f32.gmra.mxu0 %v335
    %v428 = vpop.f32.mrf.mxu0
    %v429 = vadd.f32 %v360, %v428
    %v430 = vpop.f32.mrf.mxu0
    %431 = vmatprep.mubr.f32.mxu0 0.0
    %432 = vmatmul.mubr.f32.gmra.mxu0 %v336
    %v433 = vpop.f32.mrf.mxu0
    %v434 = vadd.f32 %v360, %v433
    %v435 = vpop.f32.mrf.mxu0
    %436 = vmatprep.mubr.f32.mxu0 0.0
    %437 = vmatmul.mubr.f32.gmra.mxu0 %v337
    %v438 = vpop.f32.mrf.mxu0
    %v439 = vadd.f32 %v360, %v438
    %v440 = vpop.f32.mrf.mxu0
    %441 = vmatprep.mubr.f32.mxu0 0.0
    %442 = vmatmul.mubr.f32.gmra.mxu0 %v338
    %v443 = vpop.f32.mrf.mxu0
    %v444 = vadd.f32 %v360, %v443
    %v445 = vpop.f32.mrf.mxu0
    %446 = vdwg.mxu0
    %447 = vst [vmem:[#allocation10] sm:$0xff] %v429
    %448 = vst [vmem:[#allocation10 + $0x8] sm:$0xff] %v434
    %449 = vst [vmem:[#allocation10 + $0x10] sm:$0xff] %v439
    %450 = vst [vmem:[#allocation10 + $0x18] sm:$0xff] %v444
    // Predicated region
    $region46: #{tpu_custom_call.1} parent=1 // pred_check
      _
    $region47: #{tpu_custom_call.1} parent=1 // pred_check_branch
      %452 = sbr.rel (0) target = $region49
    $region48: #{tpu_custom_call.1} parent=1 // pred_region
      %s454 = ssub.s32 512, 512
      %455 = vsyncadd [#allocation4], %s454
      %s456 = sshll.u32 [#allocation10], 4
      %s457 = int_to_ptr.vmem [resolvable:$true] %s456
      %462 = dma.vmem_to_hbm [thread:$0]  %s457, 512, %s7, [#allocation4], 128, 128, 8
    $region49: #{tpu_custom_call.1} parent=1 // pred_fallthru
      _
    // Predicated region
    $region50: #{tpu_custom_call.1} parent=1 // pred_check
      _
    $region51: #{tpu_custom_call.1} parent=1 // pred_check_branch
      %464 = sbr.rel (0) target = $region53
    $region52: #{tpu_custom_call.1} parent=1 // pred_region
      %465 = dma.done [#allocation4], 512
    $region53: #{tpu_custom_call.1} parent=1 // pred_fallthru
      _
    %466 = vsyncpa [#allocation3], 1
    %467 = vsyncpa [#allocation6], 1
    %468 = vsyncpa [#allocation9], 1
    %469 = vsyncpa [#allocation4], 1

</llo_original>
